<compile_context>
chip_gen: v6e
topology: v6e:2x2x1
jax: 0.10.0
libtpu: 0.0.40
codegen_flags: <defaults>
</compile_context>

<pallas_src>
import functools

import jax
import jax.numpy as jnp
from jax.experimental import pallas as pl
from jax.experimental.pallas import tpu as pltpu


def _round_up(x, m):
    return (x + m - 1) // m * m


def _largest_div_tile(padded, cap):
    """Largest multiple of 128 that divides `padded` and is <= cap (>=128)."""
    t = max(128, min(cap, padded))
    t -= t % 128
    t = max(t, 128)
    while padded % t:
        t -= 128
    return t


@functools.lru_cache(maxsize=None)
def _vmem_budget_bytes():
    # Real VMEM capacity: 128 MiB on v5e/v6e, 64 MiB on v7x.  Keep headroom
    # for Mosaic-internal scratch and semaphores.
    try:
        cap = int(pltpu.get_tpu_info().vmem_capacity_bytes)
    except Exception:  # off-TPU tracing / older jax: assume the smallest (v7x)
        cap = 64 << 20
    return min(int(cap * 3 // 4), 96 << 20)


def _vmem_usage_bytes(tm, tk, tn, h_pad, itemsize):
    # Double-buffered pipelined blocks + the f32 fc1 accumulator.
    return (2 * tm * tk * itemsize          # x blocks
            + 2 * tk * h_pad * itemsize     # w1 blocks
            + 2 * 8 * h_pad * itemsize      # b1 (sublane-padded)
            + 2 * h_pad * tn * itemsize     # w2 blocks
            + 2 * 8 * tn * itemsize         # b2
            + 2 * tm * tn * itemsize        # out blocks
            + tm * h_pad * 4)               # f32 hidden accumulator


def _mlp_kernel(x_ref, w1_ref, b1_ref, w2_ref, b2_ref, o_ref, h_acc, *, num_k):
    t = pl.program_id(1)

    @pl.when(t == 0)
    def _():
        h_acc[...] = jnp.zeros_like(h_acc)

    # ---- phase 1: fc1 K-reduction, pure MXU accumulate into f32 scratch ----
    @pl.when(t < num_k)
    def _():
        h_acc[...] += jnp.dot(x_ref[...], w1_ref[...],
                              preferred_element_type=jnp.float32)

    # ---- phase transition: bias + ReLU applied once, in place ----
    @pl.when(t == num_k)
    def _():
        h_acc[...] = jnp.maximum(h_acc[...] + b1_ref[...].astype(jnp.float32),
                                 0.0)

    # ---- phase 2: fc2 for one OUT tile per step ----
    @pl.when(t >= num_k)
    def _():
        y = jnp.dot(h_acc[...].astype(w2_ref.dtype), w2_ref[...],
                    preferred_element_type=jnp.float32)
        o_ref[...] = (y + b2_ref[...].astype(jnp.float32)).astype(o_ref.dtype)


def _build_call(dtype, b_pad, in_pad, h_pad, out_pad, tm, tk, tn, vmem_limit):
    num_m = b_pad // tm
    num_k = in_pad // tk
    num_n = out_pad // tn
    num_t = num_k + num_n          # fused K-reduction + N-streaming axis
    last_k = num_k - 1

    # Clamped index maps: during phase 2 the x/w1 blocks stay pinned (no DMA);
    # during phase 1 the w2/b2/out blocks stay pinned at n=0 (w2 block 0 is
    # prefetched under the fc1 compute, outputs are never written back early).
    def x_map(i, t):
        return (i, jnp.minimum(t, last_k))

    def w1_map(i, t):
        return (jnp.minimum(t, last_k), 0)

    def b1_map(i, t):
        return (0, 0)

    def w2_map(i, t):
        return (0, jnp.maximum(t - num_k, 0))

    def b2_map(i, t):
        return (0, jnp.maximum(t - num_k, 0))

    def out_map(i, t):
        return (i, jnp.maximum(t - num_k, 0))

    itemsize = jnp.dtype(dtype).itemsize
    flops = 2 * b_pad * in_pad * h_pad + 2 * b_pad * h_pad * out_pad
    bytes_accessed = itemsize * (
        b_pad * in_pad                                     # x read once
        + num_m * in_pad * h_pad                           # w1 per M tile
        + num_m * (h_pad + h_pad * out_pad + out_pad)      # b1, w2, b2 per M tile
        + b_pad * out_pad)                                 # output written once

    return pl.pallas_call(
        functools.partial(_mlp_kernel, num_k=num_k),
        out_shape=jax.ShapeDtypeStruct((b_pad, out_pad), dtype),
        grid=(num_m, num_t),
        in_specs=[
            pl.BlockSpec((tm, tk), x_map),        # x   (M, K tiled)
            pl.BlockSpec((tk, h_pad), w1_map),    # w1  (K tiled)
            pl.BlockSpec((1, h_pad), b1_map),     # b1
            pl.BlockSpec((h_pad, tn), w2_map),    # w2  (N tiled)
            pl.BlockSpec((1, tn), b2_map),        # b2  (N tiled)
        ],
        out_specs=pl.BlockSpec((tm, tn), out_map),
        scratch_shapes=[pltpu.VMEM((tm, h_pad), jnp.float32)],  # fc1 accumulator
        compiler_params=pltpu.CompilerParams(
            dimension_semantics=("parallel", "arbitrary"),
            vmem_limit_bytes=vmem_limit),
        cost_estimate=pl.CostEstimate(
            flops=flops, transcendentals=0, bytes_accessed=bytes_accessed),
    )


@functools.partial(jax.jit, static_argnames=("tm", "tk", "tn"))
def mlp_forward(x, w1, b1, w2, b2, *, tm=256, tk=512, tn=512):
    """x: (B, IN); w1: (IN, H); b1: (1, H); w2: (H, OUT); b2: (1, OUT)."""
    B, IN = x.shape
    H = w1.shape[1]
    OUT = w2.shape[1]
    dtype = x.dtype
    itemsize = jnp.dtype(dtype).itemsize

    # Lane-dense padding: feature dims only need multiples of 128.
    IN_pad = _round_up(IN, 128)
    H_pad = _round_up(H, 128)
    OUT_pad = _round_up(OUT, 128)
    TK = _largest_div_tile(IN_pad, tk)
    TN = _largest_div_tile(OUT_pad, tn)

    # TM: big batch tiles cut per-M-tile weight re-streaming (HBM-bound regime);
    # keep >= 2 M tiles when the batch allows so the "parallel" axis can shard
    # across v7x's two TensorCores.
    if B >= 2 * tm:
        TM = tm
    elif B >= 16:
        TM = _round_up((B + 1) // 2, 8)
    else:
        TM = _round_up(max(B, 1), 8)

    # Shrink tiles until the double-buffered working set fits the VMEM budget.
    budget = _vmem_budget_bytes()
    while _vmem_usage_bytes(TM, TK, TN, H_pad, itemsize) > budget:
        if TN > 128:
            TN = _largest_div_tile(OUT_pad, TN - 128)
        elif TK > 128:
            TK = _largest_div_tile(IN_pad, TK - 128)
        elif TM > 8:
            TM = _round_up(max(TM // 2, 8), 8)
        else:
            # TODO(synk): tile the hidden dim too for very wide H; the w1 block
            # and the f32 accumulator currently scale with H_pad.
            break

    B_pad = _round_up(B, TM)

    # Zero-padding of features / bias columns / batch rows is exact; padded
    # output columns/rows are sliced off below.  (Callers doing many forward
    # passes can pre-pad the weights once to skip this per-call work.)
    x_p = jnp.pad(x, ((0, B_pad - B), (0, IN_pad - IN)))
    w1_p = jnp.pad(w1, ((0, IN_pad - IN), (0, H_pad - H)))
    b1_p = jnp.pad(b1, ((0, 0), (0, H_pad - H)))
    w2_p = jnp.pad(w2, ((0, H_pad - H), (0, OUT_pad - OUT)))
    b2_p = jnp.pad(b2, ((0, 0), (0, OUT_pad - OUT)))

    call = _build_call(dtype, B_pad, IN_pad, H_pad, OUT_pad, TM, TK, TN, budget)
    out_p = call(x_p, w1_p, b1_p, w2_p, b2_p)
    return out_p[:B, :OUT]


def init_mlp_params(key, in_features, out_features, dtype=jnp.float32):
    """Deterministic init mirroring nn.Linear shapes (weights pre-transposed)."""
    k1, k2, k3, k4 = jax.random.split(key, 4)
    bound = 1.0 / jnp.sqrt(in_features)
    w1 = jax.random.uniform(k1, (in_features, in_features), dtype,
                            minval=-bound, maxval=bound)
    b1 = jax.random.uniform(k2, (1, in_features), dtype,
                            minval=-bound, maxval=bound)
    w2 = jax.random.uniform(k3, (in_features, out_features), dtype,
                            minval=-bound, maxval=bound)
    b2 = jax.random.uniform(k4, (1, out_features), dtype,
                            minval=-bound, maxval=bound)
    return w1, b1, w2, b2


if __name__ == "__main__":
    key = jax.random.PRNGKey(0)

    # --- small shapes matching the module spec: MLP(in_features=32, out=16) ---
    batch, in_features, out_features = 8, 32, 16
    kx, kp, kx2, kp2 = jax.random.split(key, 4)
    x = jax.random.normal(kx, (batch, in_features), jnp.float32)
    w1, b1, w2, b2 = init_mlp_params(kp, in_features, out_features)

    ref = jnp.maximum(x @ w1 + b1, 0.0) @ w2 + b2

    out = jax.block_until_ready(mlp_forward(x, w1, b1, w2, b2))
    assert out.shape == (batch, out_features)
    assert jnp.allclose(out, ref, atol=1e-5, rtol=1e-5)

    # bf16 path (recommended on v6e/v7x MXU): loose tolerance vs f32 reference.
    to_bf16 = lambda a: a.astype(jnp.bfloat16)
    out_bf16 = jax.block_until_ready(
        mlp_forward(to_bf16(x), to_bf16(w1), to_bf16(b1),
                    to_bf16(w2), to_bf16(b2)))
    assert out_bf16.shape == (batch, out_features)
    assert float(jnp.max(jnp.abs(out_bf16.astype(jnp.float32) - ref))) < 0.5

    # --- multi-tile path: 2 M tiles, 2 K tiles, 2 N tiles (still small) ---
    b2_, in2, out2 = 64, 256, 256
    x2 = jax.random.normal(kx2, (b2_, in2), jnp.float32)
    p2 = init_mlp_params(kp2, in2, out2)
    ref2 = jnp.maximum(x2 @ p2[0] + p2[1], 0.0) @ p2[2] + p2[3]
    out2_ = jax.block_until_ready(mlp_forward(x2, *p2, tk=128, tn=128))
    assert out2_.shape == (b2_, out2)
    assert jnp.allclose(out2_, ref2, atol=1e-4, rtol=1e-4)

    print("KERNEL_OK")
</pallas_src>

<mosaic_0001>
module attributes {stable_mosaic.version = 11 : i64} {
  func.func @_mlp_kernel(%arg0: i32, %arg1: i32, %arg2: memref<8x128xf32, #tpu.memory_space<vmem>>, %arg3: memref<128x128xf32, #tpu.memory_space<vmem>>, %arg4: memref<1x128xf32, #tpu.memory_space<vmem>>, %arg5: memref<128x128xf32, #tpu.memory_space<vmem>>, %arg6: memref<1x128xf32, #tpu.memory_space<vmem>>, %arg7: memref<8x128xf32, #tpu.memory_space<vmem>>, %arg8: memref<8x128xf32, #tpu.memory_space<vmem>>) attributes {dimension_semantics = [#tpu.dimension_semantics<parallel>, #tpu.dimension_semantics<arbitrary>], iteration_bounds = array<i64: 1, 2>, scalar_prefetch = 0 : i64, scratch_operands = 1 : i64, tpu.core_type = #tpu.core_type<tc>, window_params = [{transform_indices = @transform_0, window_bounds = array<i64: 8, 128>}, {transform_indices = @transform_1, window_bounds = array<i64: 128, 128>}, {pipeline_mode = #tpu.pipeline_mode<synchronous>, transform_indices = @transform_2, window_bounds = array<i64: 1, 128>}, {transform_indices = @transform_3, window_bounds = array<i64: 128, 128>}, {transform_indices = @transform_4, window_bounds = array<i64: 1, 128>}, {transform_indices = @transform_5, window_bounds = array<i64: 8, 128>}]} {
    %c0_i32 = arith.constant 0 : i32
    %0 = arith.cmpi eq, %arg1, %c0_i32 : i32
    %1 = arith.extui %0 : i1 to i32
    %c0_i32_0 = arith.constant 0 : i32
    %2 = arith.cmpi ne, %1, %c0_i32_0 : i32
    scf.if %2 {
      %cst = arith.constant 0.000000e+00 : f32
      %12 = vector.broadcast %cst : f32 to vector<8x128xf32>
      %c0 = arith.constant 0 : index
      %c0_6 = arith.constant 0 : index
      %13 = vector.load %arg8[%c0, %c0_6] : memref<8x128xf32, #tpu.memory_space<vmem>>, vector<8x128xf32>
      tpu.vector_store %arg8[%c0, %c0_6], %12 {strides = array<i32>} : memref<8x128xf32, #tpu.memory_space<vmem>>, vector<8x128xf32>,
    } else {
    }
    %c1_i32 = arith.constant 1 : i32
    %3 = arith.cmpi slt, %arg1, %c1_i32 : i32
    %4 = arith.extui %3 : i1 to i32
    %c0_i32_1 = arith.constant 0 : i32
    %5 = arith.cmpi ne, %4, %c0_i32_1 : i32
    scf.if %5 {
      %c0 = arith.constant 0 : index
      %c0_6 = arith.constant 0 : index
      %12 = vector.load %arg8[%c0, %c0_6] : memref<8x128xf32, #tpu.memory_space<vmem>>, vector<8x128xf32>
      %c0_7 = arith.constant 0 : index
      %c0_8 = arith.constant 0 : index
      %13 = vector.load %arg2[%c0_7, %c0_8] : memref<8x128xf32, #tpu.memory_space<vmem>>, vector<8x128xf32>
      %c0_9 = arith.constant 0 : index
      %c0_10 = arith.constant 0 : index
      %14 = vector.load %arg3[%c0_9, %c0_10] : memref<128x128xf32, #tpu.memory_space<vmem>>, vector<128x128xf32>
      %cst = arith.constant dense<0.000000e+00> : vector<8x128xf32>
      %15 = tpu.matmul %13, %14, %cst {dimension_numbers = #tpu.dot_dimension_numbers<[1], [0], [0], [1], [0, 0, 1, 1], [], []>} : vector<8x128xf32>, vector<128x128xf32>, vector<8x128xf32> -> vector<8x128xf32>
      %16 = arith.addf %12, %15 : vector<8x128xf32>
      %c0_11 = arith.constant 0 : index
      %c0_12 = arith.constant 0 : index
      %17 = vector.load %arg8[%c0_11, %c0_12] : memref<8x128xf32, #tpu.memory_space<vmem>>, vector<8x128xf32>
      tpu.vector_store %arg8[%c0_11, %c0_12], %16 {strides = array<i32>} : memref<8x128xf32, #tpu.memory_space<vmem>>, vector<8x128xf32>,
    } else {
    }
    %c1_i32_2 = arith.constant 1 : i32
    %6 = arith.cmpi eq, %arg1, %c1_i32_2 : i32
    %7 = arith.extui %6 : i1 to i32
    %c0_i32_3 = arith.constant 0 : i32
    %8 = arith.cmpi ne, %7, %c0_i32_3 : i32
    scf.if %8 {
      %c0 = arith.constant 0 : index
      %c0_6 = arith.constant 0 : index
      %12 = vector.load %arg8[%c0, %c0_6] : memref<8x128xf32, #tpu.memory_space<vmem>>, vector<8x128xf32>
      %c0_7 = arith.constant 0 : index
      %c0_8 = arith.constant 0 : index
      %13 = vector.load %arg4[%c0_7, %c0_8] : memref<1x128xf32, #tpu.memory_space<vmem>>, vector<1x128xf32>
      %14 = vector.broadcast %13 : vector<1x128xf32> to vector<8x128xf32>
      %15 = arith.addf %12, %14 : vector<8x128xf32>
      %cst = arith.constant 0.000000e+00 : f32
      %16 = vector.broadcast %cst : f32 to vector<8x128xf32>
      %17 = arith.maximumf %15, %16 : vector<8x128xf32>
      %c0_9 = arith.constant 0 : index
      %c0_10 = arith.constant 0 : index
      %18 = vector.load %arg8[%c0_9, %c0_10] : memref<8x128xf32, #tpu.memory_space<vmem>>, vector<8x128xf32>
      tpu.vector_store %arg8[%c0_9, %c0_10], %17 {strides = array<i32>} : memref<8x128xf32, #tpu.memory_space<vmem>>, vector<8x128xf32>,
    } else {
    }
    %c1_i32_4 = arith.constant 1 : i32
    %9 = arith.cmpi sge, %arg1, %c1_i32_4 : i32
    %10 = arith.extui %9 : i1 to i32
    %c0_i32_5 = arith.constant 0 : i32
    %11 = arith.cmpi ne, %10, %c0_i32_5 : i32
    scf.if %11 {
      %c0 = arith.constant 0 : index
      %c0_6 = arith.constant 0 : index
      %12 = vector.load %arg8[%c0, %c0_6] : memref<8x128xf32, #tpu.memory_space<vmem>>, vector<8x128xf32>
      %c0_7 = arith.constant 0 : index
      %c0_8 = arith.constant 0 : index
      %13 = vector.load %arg5[%c0_7, %c0_8] : memref<128x128xf32, #tpu.memory_space<vmem>>, vector<128x128xf32>
      %cst = arith.constant dense<0.000000e+00> : vector<8x128xf32>
      %14 = tpu.matmul %12, %13, %cst {dimension_numbers = #tpu.dot_dimension_numbers<[1], [0], [0], [1], [0, 0, 1, 1], [], []>} : vector<8x128xf32>, vector<128x128xf32>, vector<8x128xf32> -> vector<8x128xf32>
      %c0_9 = arith.constant 0 : index
      %c0_10 = arith.constant 0 : index
      %15 = vector.load %arg6[%c0_9, %c0_10] : memref<1x128xf32, #tpu.memory_space<vmem>>, vector<1x128xf32>
      %16 = vector.broadcast %15 : vector<1x128xf32> to vector<8x128xf32>
      %17 = arith.addf %14, %16 : vector<8x128xf32>
      %c0_11 = arith.constant 0 : index
      %c0_12 = arith.constant 0 : index
      %18 = vector.load %arg7[%c0_11, %c0_12] : memref<8x128xf32, #tpu.memory_space<vmem>>, vector<8x128xf32>
      tpu.vector_store %arg7[%c0_11, %c0_12], %17 {strides = array<i32>} : memref<8x128xf32, #tpu.memory_space<vmem>>, vector<8x128xf32>,
    } else {
    }
    return
  }
  func.func @transform_0(%arg0: i32, %arg1: i32) -> (i32, i32) {
    %c0_i32 = arith.constant 0 : i32
    %0 = arith.minsi %arg1, %c0_i32 : i32
    %c0_i32_0 = arith.constant 0 : i32
    return %arg0, %0 : i32, i32
  }
  func.func @transform_1(%arg0: i32, %arg1: i32) -> (i32, i32) {
    %c0_i32 = arith.constant 0 : i32
    %0 = arith.minsi %arg1, %c0_i32 : i32
    %c0_i32_0 = arith.constant 0 : i32
    %c0_i32_1 = arith.constant 0 : i32
    return %0, %c0_i32_0 : i32, i32
  }
  func.func @transform_2(%arg0: i32, %arg1: i32) -> (i32, i32) {
    %c0_i32 = arith.constant 0 : i32
    %c0_i32_0 = arith.constant 0 : i32
    %c0_i32_1 = arith.constant 0 : i32
    return %c0_i32, %c0_i32_0 : i32, i32
  }
  func.func @transform_3(%arg0: i32, %arg1: i32) -> (i32, i32) {
    %c1_i32 = arith.constant 1 : i32
    %0 = arith.subi %arg1, %c1_i32 : i32
    %c0_i32 = arith.constant 0 : i32
    %1 = arith.maxsi %0, %c0_i32 : i32
    %c0_i32_0 = arith.constant 0 : i32
    %c0_i32_1 = arith.constant 0 : i32
    return %c0_i32_0, %1 : i32, i32
  }
  func.func @transform_4(%arg0: i32, %arg1: i32) -> (i32, i32) {
    %c1_i32 = arith.constant 1 : i32
    %0 = arith.subi %arg1, %c1_i32 : i32
    %c0_i32 = arith.constant 0 : i32
    %1 = arith.maxsi %0, %c0_i32 : i32
    %c0_i32_0 = arith.constant 0 : i32
    %c0_i32_1 = arith.constant 0 : i32
    return %c0_i32_0, %1 : i32, i32
  }
  func.func @transform_5(%arg0: i32, %arg1: i32) -> (i32, i32) {
    %c1_i32 = arith.constant 1 : i32
    %0 = arith.subi %arg1, %c1_i32 : i32
    %c0_i32 = arith.constant 0 : i32
    %1 = arith.maxsi %0, %c0_i32 : i32
    %c0_i32_0 = arith.constant 0 : i32
    return %arg0, %1 : i32, i32
  }
}

</mosaic_0001>

<llo_original>
// kernel: mlp_forward.1
$region0: #{mlp_forward.1}
  #allocation0 [shape = 'u32[]', space=smem, size = 0x4, offset = 0x4, fixed_abs, tag = 'smem constant byte address 0x4 - core index']
  #allocation1 [shape = 'u32[144,128]{1,0:T(1,128)}', space=vmem, size = 0x12000, scoped, tag = 'internal scratch']
  #allocation2 [shape = 'f32[8,128]{1,0:T(8,128)}', space=vmem, size = 0x1000, scoped, tag = 'scratch operand']
  %s0 = inlined_call_operand.vmem [shape: f32[8,128], index: 0, kind: input, shape index: {}]
  %s1 = inlined_call_operand.vmem [shape: f32[128,128], index: 1, kind: input, shape index: {}]
  %s2 = inlined_call_operand.vmem [shape: f32[1,128], index: 2, kind: input, shape index: {}]
  %s3 = inlined_call_operand.vmem [shape: f32[128,128], index: 3, kind: input, shape index: {}]
  %s4 = inlined_call_operand.vmem [shape: f32[1,128], index: 4, kind: input, shape index: {}]
  %s5 = inlined_call_operand.hbm [shape: f32[8,128], index: 5, kind: output, shape index: {}]
  %s6 = sld [smem:[#allocation0]]
  $region69: #{mlp_forward.1} parent=0
    _
  %s8 = ssub.s32 1, %s6
  %s9 = scalar_select 0, %s8, %s6
  $region1: #{mlp_forward.1} parent=0
    #allocation3 [shape = 'u8[8192]{0}', space=vmem, size = 0x2000, scoped, tag = 'output window, operand 0']
    #allocation4 [shape = 's32[2]{0}', space=sflag, size = 0x8, scoped, tag = 'scoped memory for mlp_forward.1']
    %10 = vsyncpa [#allocation4], 0
    %s11 = scalar_lea.sflag [#allocation4], 1
    %12 = vsyncpa %s11, 0
    loop: start=0, step=1, limit=4
    $region2: #{mlp_forward.1} parent=1 // loop_pre_header
      _
    $region3: #{mlp_forward.1} parent=1 // loop_header
      %s14 = sphi 0, %s18
      %p15 = scmp.ge.s32.totalorder %s14, 4
      %s21 = sphi 0, %s33
      %s22 = sphi 0, %s29
      %s23 = sphi 0, %s21
      %s24 = sphi 0, %s22
      %s25 = sphi 0, %s23
      %s26 = sphi 0, %s24
      %s42 = sphi 0, %s44
      %s45 = sphi 0, %s42
      %s46 = sphi 0, %s45
      %s62 = sphi 0, %s46
      %s72 = sphi 0, %s74
      %s75 = sphi 0, %s72
      %s76 = sphi 0, %s75
      %s92 = sphi 0, %s76
      %s96 = sphi 0, %s96
      %s98 = sphi 0, %s96
      %s99 = sphi 0, %s98
      %s113 = sphi 0, %s99
      %s125 = sphi 0, %s127
      %s128 = sphi 0, %s125
      %s129 = sphi 0, %s128
      %s145 = sphi 0, %s129
      %s157 = sphi 0, %s159
      %s160 = sphi 0, %s157
      %s161 = sphi 0, %s160
      %s177 = sphi 0, %s161
      %s191 = sphi 0, %s193
      %s194 = sphi 0, %s191
      %s195 = sphi 0, %s194
      %s211 = sphi 0, %s195
    $region4: #{mlp_forward.1} parent=1 // loop_header_branch
      %17 = sbr.rel (%p15) target = $region8
    $region5: #{mlp_forward.1} parent=1 // loop_body
      %s19 = ssub.s32 %s14, 1
      %s20 = ssub.s32 %s14, 2
      %s27 = sadd.s32 1, %s22
      %p28 = scmp.ge.s32.totalorder %s27, 2
      %s29 = scalar_select %p28, 0, %s27
      %s30 = sadd.s32 1, %s21
      %s31 = scalar_select %p28, %s30, %s21
      %p32 = scmp.ge.s32.totalorder %s31, 1
      %s33 = scalar_select %p32, 0, %s31
      %p34 = scmp.lt.s32.totalorder %s22, 0
      %s35 = scalar_select %p34, %s22, 0
      %p36 = scmp.lt.s32.totalorder %s29, 0
      %s37 = scalar_select %p36, %s29, 0
      %s38 = ssub.s32 %s21, %s33
      %s39 = ssub.s32 %s35, %s37
      %s40 = sor.u32 %s38, %s39
      %p41 = scmp.eq.s32.totalorder %s40, 0
      %s43 = sadd.s32 %s42, 1
      %s44 = scalar_select %p41, %s42, %s43
      %p47 = pneg %p41
      %p48 = scmp.eq.s32.totalorder %s14, 1
      %p49 = por %p47, %p48
      %p50 = scmp.ne.s32.totalorder %s42, %s45
      %p51 = scmp.eq.s32.totalorder %s14, 0
      %p52 = por %p50, %p51
      %p53 = scmp.ne.s32.totalorder %s42, %s45
      %p54 = scmp.eq.s32.totalorder %s19, 1
      %p55 = por %p53, %p54
      %p56 = scmp.ne.s32.totalorder %s45, %s46
      %p57 = scmp.eq.s32.totalorder %s19, 0
      %p58 = por %p56, %p57
      %p59 = scmp.ne.s32.totalorder %s45, %s46
      %p60 = scmp.eq.s32.totalorder %s20, 1
      %p61 = por %p59, %p60
      %p63 = scmp.ne.s32.totalorder %s46, %s62
      %p64 = scmp.eq.s32.totalorder %s20, 0
      %p65 = por %p63, %p64
      %p66 = scmp.lt.s32.totalorder %s22, 0
      %s67 = scalar_select %p66, %s22, 0
      %p68 = scmp.lt.s32.totalorder %s29, 0
      %s69 = scalar_select %p68, %s29, 0
      %s70 = ssub.s32 %s67, %s69
      %p71 = scmp.eq.s32.totalorder %s70, 0
      %s73 = sadd.s32 %s72, 1
      %s74 = scalar_select %p71, %s72, %s73
      %p77 = pneg %p71
      %p78 = scmp.eq.s32.totalorder %s14, 1
      %p79 = por %p77, %p78
      %p80 = scmp.ne.s32.totalorder %s72, %s75
      %p81 = scmp.eq.s32.totalorder %s14, 0
      %p82 = por %p80, %p81
      %p83 = scmp.ne.s32.totalorder %s72, %s75
      %p84 = scmp.eq.s32.totalorder %s19, 1
      %p85 = por %p83, %p84
      %p86 = scmp.ne.s32.totalorder %s75, %s76
      %p87 = scmp.eq.s32.totalorder %s19, 0
      %p88 = por %p86, %p87
      %p89 = scmp.ne.s32.totalorder %s75, %s76
      %p90 = scmp.eq.s32.totalorder %s20, 1
      %p91 = por %p89, %p90
      %p93 = scmp.ne.s32.totalorder %s76, %s92
      %p94 = scmp.eq.s32.totalorder %s20, 0
      %p95 = por %p93, %p94
      %s97 = sadd.s32 %s96, 1
      %p100 = scmp.eq.s32.totalorder %s14, 1
      %p101 = scmp.ne.s32.totalorder %s96, %s98
      %p102 = scmp.eq.s32.totalorder %s14, 0
      %p103 = por %p101, %p102
      %p104 = scmp.ne.s32.totalorder %s96, %s98
      %p105 = scmp.eq.s32.totalorder %s19, 1
      %p106 = por %p104, %p105
      %p107 = scmp.ne.s32.totalorder %s98, %s99
      %p108 = scmp.eq.s32.totalorder %s19, 0
      %p109 = por %p107, %p108
      %p110 = scmp.ne.s32.totalorder %s98, %s99
      %p111 = scmp.eq.s32.totalorder %s20, 1
      %p112 = por %p110, %p111
      %p114 = scmp.ne.s32.totalorder %s99, %s113
      %p115 = scmp.eq.s32.totalorder %s20, 0
      %p116 = por %p114, %p115
      %s117 = ssub.s32 %s22, 1
      %p118 = scmp.gt.s32.totalorder %s117, 0
      %s119 = scalar_select %p118, %s117, 0
      %s120 = ssub.s32 %s29, 1
      %p121 = scmp.gt.s32.totalorder %s120, 0
      %s122 = scalar_select %p121, %s120, 0
      %s123 = ssub.s32 %s119, %s122
      %p124 = scmp.eq.s32.totalorder %s123, 0
      %s126 = sadd.s32 %s125, 1
      %s127 = scalar_select %p124, %s125, %s126
      %p130 = pneg %p124
      %p131 = scmp.eq.s32.totalorder %s14, 1
      %p132 = por %p130, %p131
      %p133 = scmp.ne.s32.totalorder %s125, %s128
      %p134 = scmp.eq.s32.totalorder %s14, 0
      %p135 = por %p133, %p134
      %p136 = scmp.ne.s32.totalorder %s125, %s128
      %p137 = scmp.eq.s32.totalorder %s19, 1
      %p138 = por %p136, %p137
      %p139 = scmp.ne.s32.totalorder %s128, %s129
      %p140 = scmp.eq.s32.totalorder %s19, 0
      %p141 = por %p139, %p140
      %p142 = scmp.ne.s32.totalorder %s128, %s129
      %p143 = scmp.eq.s32.totalorder %s20, 1
      %p144 = por %p142, %p143
      %p146 = scmp.ne.s32.totalorder %s129, %s145
      %p147 = scmp.eq.s32.totalorder %s20, 0
      %p148 = por %p146, %p147
      %s149 = ssub.s32 %s22, 1
      %p150 = scmp.gt.s32.totalorder %s149, 0
      %s151 = scalar_select %p150, %s149, 0
      %s152 = ssub.s32 %s29, 1
      %p153 = scmp.gt.s32.totalorder %s152, 0
      %s154 = scalar_select %p153, %s152, 0
      %s155 = ssub.s32 %s151, %s154
      %p156 = scmp.eq.s32.totalorder %s155, 0
      %s158 = sadd.s32 %s157, 1
      %s159 = scalar_select %p156, %s157, %s158
      %p162 = pneg %p156
      %p163 = scmp.eq.s32.totalorder %s14, 1
      %p164 = por %p162, %p163
      %p165 = scmp.ne.s32.totalorder %s157, %s160
      %p166 = scmp.eq.s32.totalorder %s14, 0
      %p167 = por %p165, %p166
      %p168 = scmp.ne.s32.totalorder %s157, %s160
      %p169 = scmp.eq.s32.totalorder %s19, 1
      %p170 = por %p168, %p169
      %p171 = scmp.ne.s32.totalorder %s160, %s161
      %p172 = scmp.eq.s32.totalorder %s19, 0
      %p173 = por %p171, %p172
      %p174 = scmp.ne.s32.totalorder %s160, %s161
      %p175 = scmp.eq.s32.totalorder %s20, 1
      %p176 = por %p174, %p175
      %p178 = scmp.ne.s32.totalorder %s161, %s177
      %p179 = scmp.eq.s32.totalorder %s20, 0
      %p180 = por %p178, %p179
      %s181 = ssub.s32 %s22, 1
      %p182 = scmp.gt.s32.totalorder %s181, 0
      %s183 = scalar_select %p182, %s181, 0
      %s184 = ssub.s32 %s29, 1
      %p185 = scmp.gt.s32.totalorder %s184, 0
      %s186 = scalar_select %p185, %s184, 0
      %s187 = ssub.s32 %s21, %s33
      %s188 = ssub.s32 %s183, %s186
      %s189 = sor.u32 %s187, %s188
      %p190 = scmp.eq.s32.totalorder %s189, 0
      %s192 = sadd.s32 %s191, 1
      %s193 = scalar_select %p190, %s191, %s192
      %p196 = pneg %p190
      %p197 = scmp.eq.s32.totalorder %s14, 1
      %p198 = por %p196, %p197
      %p199 = scmp.ne.s32.totalorder %s191, %s194
      %p200 = scmp.eq.s32.totalorder %s14, 0
      %p201 = por %p199, %p200
      %p202 = scmp.ne.s32.totalorder %s191, %s194
      %p203 = scmp.eq.s32.totalorder %s19, 1
      %p204 = por %p202, %p203
      %p205 = scmp.ne.s32.totalorder %s194, %s195
      %p206 = scmp.eq.s32.totalorder %s19, 0
      %p207 = por %p205, %p206
      %p208 = scmp.ne.s32.totalorder %s194, %s195
      %p209 = scmp.eq.s32.totalorder %s20, 1
      %p210 = por %p208, %p209
      %p212 = scmp.ne.s32.totalorder %s195, %s211
      %p213 = scmp.eq.s32.totalorder %s20, 0
      %p214 = por %p212, %p213
      %p215 = scmp.le.s32.totalorder 1, %s14
      %p216 = scmp.lt.s32.totalorder %s14, 3
      %p217 = pnand %p215, %p216
      %p218 = pneg %p217
      // Predicated region
      $region9: #{mlp_forward.1} parent=5 // pred_check
        _
      $region10: #{mlp_forward.1} parent=5 // pred_check_branch
        %220 = sbr.rel (%p217) target = $region12
      $region11: #{mlp_forward.1} parent=5 // pred_region
        %s221 = ssub.s32 %s14, 1
        // Predicated region
        $region13: #{mlp_forward.1} parent=11 // pred_check
          %p222 = pneg %p109
        $region14: #{mlp_forward.1} parent=11 // pred_check_branch
          %224 = sbr.rel (%p222) target = $region16
        $region15: #{mlp_forward.1} parent=11 // pred_region
          _
        $region16: #{mlp_forward.1} parent=11 // pred_fallthru
          _
      $region12: #{mlp_forward.1} parent=5 // pred_fallthru
        _
      %p225 = scmp.lt.s32.totalorder %s14, 2
      // Predicated region
      $region17: #{mlp_forward.1} parent=5 // pred_check
        %p226 = pneg %p225
      $region18: #{mlp_forward.1} parent=5 // pred_check_branch
        %228 = sbr.rel (%p226) target = $region20
      $region19: #{mlp_forward.1} parent=5 // pred_region
        // Predicated region
        $region21: #{mlp_forward.1} parent=19 // pred_check
          %p229 = pneg %p52
        $region22: #{mlp_forward.1} parent=19 // pred_check_branch
          %231 = sbr.rel (%p229) target = $region24
        $region23: #{mlp_forward.1} parent=19 // pred_region
          %p232 = scmp.lt.s32.totalorder %s22, 0
          %s233 = scalar_select %p232, %s22, 0
          %p234 = scmp.lt.s32.totalorder %s21, 0
          %s235 = scalar_select %p234, %s21, 0
          %p236 = scmp.lt.s32.totalorder %s233, 0
          %s237 = scalar_select %p236, %s233, 0
          %s238 = sadd.s32 %s237, %s235
          %s239 = smul.addr %s238, 8
          %s240 = scalar_lea.vmem %s0, %s239
          %p241 = scmp.lt.s32.totalorder %s22, 0
          %s242 = scalar_select %p241, %s22, 0
        $region24: #{mlp_forward.1} parent=19 // pred_fallthru
          _
        // Predicated region
        $region25: #{mlp_forward.1} parent=19 // pred_check
          %p243 = pneg %p82
        $region26: #{mlp_forward.1} parent=19 // pred_check_branch
          %245 = sbr.rel (%p243) target = $region28
        $region27: #{mlp_forward.1} parent=19 // pred_region
          %p246 = scmp.lt.s32.totalorder %s22, 0
          %s247 = scalar_select %p246, %s22, 0
          %s248 = smul.u32 16, %s247
          %p249 = scmp.lt.s32.totalorder %s248, 15
          %s250 = scalar_select %p249, %s248, 15
          %s251 = smul.addr %s250, 8
          %s252 = scalar_lea.vmem %s1, %s251
          %p253 = scmp.lt.s32.totalorder %s22, 0
          %s254 = scalar_select %p253, %s22, 0
          %s255 = smul.u32 16, %s254
        $region28: #{mlp_forward.1} parent=19 // pred_fallthru
          _
        // Predicated region
        $region29: #{mlp_forward.1} parent=19 // pred_check
          %p256 = pneg %p135
        $region30: #{mlp_forward.1} parent=19 // pred_check_branch
          %258 = sbr.rel (%p256) target = $region32
        $region31: #{mlp_forward.1} parent=19 // pred_region
          %s259 = ssub.s32 %s22, 1
          %p260 = scmp.gt.s32.totalorder %s259, 0
          %s261 = scalar_select %p260, %s259, 0
          %p262 = scmp.lt.s32.totalorder %s261, 0
          %s263 = scalar_select %p262, %s261, 0
          %s264 = smul.addr %s263, 8
          %s265 = scalar_lea.vmem %s3, %s264
          %s266 = ssub.s32 %s22, 1
          %p267 = scmp.gt.s32.totalorder %s266, 0
          %s268 = scalar_select %p267, %s266, 0
        $region32: #{mlp_forward.1} parent=19 // pred_fallthru
          _
        // Predicated region
        $region33: #{mlp_forward.1} parent=19 // pred_check
          %p269 = pneg %p167
        $region34: #{mlp_forward.1} parent=19 // pred_check_branch
          %271 = sbr.rel (%p269) target = $region36
        $region35: #{mlp_forward.1} parent=19 // pred_region
          %s272 = ssub.s32 %s22, 1
          %p273 = scmp.gt.s32.totalorder %s272, 0
          %s274 = scalar_select %p273, %s272, 0
          %p275 = scmp.lt.s32.totalorder %s274, 0
          %s276 = scalar_select %p275, %s274, 0
          %s277 = scalar_lea.vmem %s4, %s276
          %s278 = ssub.s32 %s22, 1
          %p279 = scmp.gt.s32.totalorder %s278, 0
          %s280 = scalar_select %p279, %s278, 0
        $region36: #{mlp_forward.1} parent=19 // pred_fallthru
          _
      $region20: #{mlp_forward.1} parent=5 // pred_fallthru
        _
      %p281 = scmp.le.s32.totalorder 1, %s14
      %p282 = scmp.lt.s32.totalorder %s14, 3
      %p283 = pnand %p281, %p282
      %p284 = pneg %p283
      // Predicated region
      $region37: #{mlp_forward.1} parent=5 // pred_check
        _
      $region38: #{mlp_forward.1} parent=5 // pred_check_branch
        %286 = sbr.rel (%p283) target = $region40
      $region39: #{mlp_forward.1} parent=5 // pred_region
        %s287 = ssub.s32 %s14, 1
        %p288 = scmp.lt.s32.totalorder %s24, 0
        %s289 = scalar_select %p288, %s24, 0
        %p290 = scmp.lt.s32.totalorder %s23, 0
        %s291 = scalar_select %p290, %s23, 0
        %p292 = scmp.lt.s32.totalorder %s289, 0
        %s293 = scalar_select %p292, %s289, 0
        %s294 = sadd.s32 %s293, %s291
        %s295 = smul.addr %s294, 8
        %s296 = scalar_lea.vmem %s0, %s295
        %p297 = pneg %p58
        %p298 = pneg %p55
        %p299 = scmp.lt.s32.totalorder %s24, 0
        %s300 = scalar_select %p299, %s24, 0
        %s301 = smul.u32 16, %s300
        %p302 = scmp.lt.s32.totalorder %s301, 15
        %s303 = scalar_select %p302, %s301, 15
        %s304 = smul.addr %s303, 8
        %s305 = scalar_lea.vmem %s1, %s304
        %p306 = pneg %p88
        %p307 = pneg %p85
        %p308 = pneg %p109
        %p309 = pneg %p106
        %s310 = ssub.s32 %s24, 1
        %p311 = scmp.gt.s32.totalorder %s310, 0
        %s312 = scalar_select %p311, %s310, 0
        %p313 = scmp.lt.s32.totalorder %s312, 0
        %s314 = scalar_select %p313, %s312, 0
        %s315 = smul.addr %s314, 8
        %s316 = scalar_lea.vmem %s3, %s315
        %p317 = pneg %p141
        %p318 = pneg %p138
        %s319 = ssub.s32 %s24, 1
        %p320 = scmp.gt.s32.totalorder %s319, 0
        %s321 = scalar_select %p320, %s319, 0
        %p322 = scmp.lt.s32.totalorder %s321, 0
        %s323 = scalar_select %p322, %s321, 0
        %s324 = scalar_lea.vmem %s4, %s323
        %p325 = pneg %p173
        %p326 = pneg %p170
        %p327 = pneg %p207
        %p328 = pneg %p204
        %s329 = sand.u32 %s194, 1
        %s330 = scalar_lea.sflag [#allocation4], %s329
        %s331 = sand.u32 %s194, 1
        %s332 = smul.addr %s331, 8
        %s333 = scalar_lea.vmem [#allocation3], %s332
        %p334 = scmp.lt.s32.totalorder %s24, 0
        %s335 = scalar_select %p334, %s24, 0
        %p336 = scmp.lt.s32.totalorder %s23, 0
        %s337 = scalar_select %p336, %s23, 0
        %p338 = scmp.lt.s32.totalorder %s335, 0
        %s339 = scalar_select %p338, %s335, 0
        %s340 = sadd.s32 %s339, %s337
        %s341 = smul.addr %s340, 8
        %s342 = scalar_lea.vmem %s0, %s341
        %p343 = scmp.lt.s32.totalorder %s24, 0
        %s344 = scalar_select %p343, %s24, 0
        %p345 = scmp.lt.s32.totalorder %s24, 0
        %s346 = scalar_select %p345, %s24, 0
        %s347 = smul.u32 16, %s346
        %p348 = scmp.lt.s32.totalorder %s347, 15
        %s349 = scalar_select %p348, %s347, 15
        %s350 = smul.addr %s349, 8
        %s351 = scalar_lea.vmem %s1, %s350
        %p352 = scmp.lt.s32.totalorder %s24, 0
        %s353 = scalar_select %p352, %s24, 0
        %s354 = smul.u32 16, %s353
        %s355 = ssub.s32 %s24, 1
        %p356 = scmp.gt.s32.totalorder %s355, 0
        %s357 = scalar_select %p356, %s355, 0
        %p358 = scmp.lt.s32.totalorder %s357, 0
        %s359 = scalar_select %p358, %s357, 0
        %s360 = smul.addr %s359, 8
        %s361 = scalar_lea.vmem %s3, %s360
        %s362 = ssub.s32 %s24, 1
        %p363 = scmp.gt.s32.totalorder %s362, 0
        %s364 = scalar_select %p363, %s362, 0
        %s365 = ssub.s32 %s24, 1
        %p366 = scmp.gt.s32.totalorder %s365, 0
        %s367 = scalar_select %p366, %s365, 0
        %p368 = scmp.lt.s32.totalorder %s367, 0
        %s369 = scalar_select %p368, %s367, 0
        %s370 = scalar_lea.vmem %s4, %s369
        %s371 = ssub.s32 %s24, 1
        %p372 = scmp.gt.s32.totalorder %s371, 0
        %s373 = scalar_select %p372, %s371, 0
        %s374 = ssub.s32 %s24, 1
        %p375 = scmp.gt.s32.totalorder %s374, 0
        %s376 = scalar_select %p375, %s374, 0
        %p377 = scmp.eq.s32.totalorder %s24, 0
        // Predicated region
        $region41: #{mlp_forward.1} parent=39 // pred_check
          %p378 = pneg %p377
        $region42: #{mlp_forward.1} parent=39 // pred_check_branch
          %380 = sbr.rel (%p378) target = $region44
        $region43: #{mlp_forward.1} parent=39 // pred_region
          %381 = vst [vmem:[#allocation2] sm:$0xff] 0.0
        $region44: #{mlp_forward.1} parent=39 // pred_fallthru
          _
        %p382 = scmp.lt.s32.totalorder %s24, 1
        // Predicated region
        $region45: #{mlp_forward.1} parent=39 // pred_check
          %p383 = pneg %p382
        $region46: #{mlp_forward.1} parent=39 // pred_check_branch
          %385 = sbr.rel (%p383) target = $region48
        $region47: #{mlp_forward.1} parent=39 // pred_region
          %v386 = vld [vmem:[#allocation2] sm:$0xff]
          %v387 = vld [vmem:[%s342] sm:$0xff]
          %v388 = vld [vmem:[%s351] sm:$0xff]
          %v389 = vld [vmem:[%s351 + $0x8] sm:$0xff]
          %v390 = vld [vmem:[%s351 + $0x10] sm:$0xff]
          %v391 = vld [vmem:[%s351 + $0x18] sm:$0xff]
          %v392 = vld [vmem:[%s351 + $0x20] sm:$0xff]
          %v393 = vld [vmem:[%s351 + $0x28] sm:$0xff]
          %v394 = vld [vmem:[%s351 + $0x30] sm:$0xff]
          %v395 = vld [vmem:[%s351 + $0x38] sm:$0xff]
          %v396 = vld [vmem:[%s351 + $0x40] sm:$0xff]
          %v397 = vld [vmem:[%s351 + $0x48] sm:$0xff]
          %v398 = vld [vmem:[%s351 + $0x50] sm:$0xff]
          %v399 = vld [vmem:[%s351 + $0x58] sm:$0xff]
          %v400 = vld [vmem:[%s351 + $0x60] sm:$0xff]
          %v401 = vld [vmem:[%s351 + $0x68] sm:$0xff]
          %v402 = vld [vmem:[%s351 + $0x70] sm:$0xff]
          %v403 = vld [vmem:[%s351 + $0x78] sm:$0xff]
          %404 = vmatprep.subr.mxu0 0.0
          %405 = vmatpush1.msra.mxu0 %v403
          %406 = vmatprep.subr.mxu0 0.0
          %407 = vmatpush1.msra.mxu0 %v402
          %408 = vmatprep.subr.mxu0 0.0
          %409 = vmatpush1.msra.mxu0 %v401
          %410 = vmatprep.subr.mxu0 0.0
          %411 = vmatpush1.msra.mxu0 %v400
          %412 = vmatprep.subr.mxu0 0.0
          %413 = vmatpush1.msra.mxu0 %v399
          %414 = vmatprep.subr.mxu0 0.0
          %415 = vmatpush1.msra.mxu0 %v398
          %416 = vmatprep.subr.mxu0 0.0
          %417 = vmatpush1.msra.mxu0 %v397
          %418 = vmatprep.subr.mxu0 0.0
          %419 = vmatpush1.msra.mxu0 %v396
          %420 = vmatprep.subr.mxu0 0.0
          %421 = vmatpush1.msra.mxu0 %v395
          %422 = vmatprep.subr.mxu0 0.0
          %423 = vmatpush1.msra.mxu0 %v394
          %424 = vmatprep.subr.mxu0 0.0
          %425 = vmatpush1.msra.mxu0 %v393
          %426 = vmatprep.subr.mxu0 0.0
          %427 = vmatpush1.msra.mxu0 %v392
          %428 = vmatprep.subr.mxu0 0.0
          %429 = vmatpush1.msra.mxu0 %v391
          %430 = vmatprep.subr.mxu0 0.0
          %431 = vmatpush1.msra.mxu0 %v390
          %432 = vmatprep.subr.mxu0 0.0
          %433 = vmatpush1.msra.mxu0 %v389
          %434 = vmatprep.subr.mxu0 0.0
          %435 = vmatpush1.msra.mxu0 %v388
          %436 = vmatprep.subr.mxu0 0.0
          %437 = vmatpush2.msra.mxu0 0.0
          %438 = vmatprep.subr.mxu0 0.0
          %439 = vmatpush2.msra.mxu0 0.0
          %440 = vmatprep.subr.mxu0 0.0
          %441 = vmatpush2.msra.mxu0 0.0
          %442 = vmatprep.subr.mxu0 0.0
          %443 = vmatpush2.msra.mxu0 0.0
          %444 = vmatprep.subr.mxu0 0.0
          %445 = vmatpush2.msra.mxu0 0.0
          %446 = vmatprep.subr.mxu0 0.0
          %447 = vmatpush2.msra.mxu0 0.0
          %448 = vmatprep.subr.mxu0 0.0
          %449 = vmatpush2.msra.mxu0 0.0
          %450 = vmatprep.subr.mxu0 0.0
          %451 = vmatpush2.msra.mxu0 0.0
          %452 = vmatprep.subr.mxu0 0.0
          %453 = vmatpush2.msra.mxu0 0.0
          %454 = vmatprep.subr.mxu0 0.0
          %455 = vmatpush2.msra.mxu0 0.0
          %456 = vmatprep.subr.mxu0 0.0
          %457 = vmatpush2.msra.mxu0 0.0
          %458 = vmatprep.subr.mxu0 0.0
          %459 = vmatpush2.msra.mxu0 0.0
          %460 = vmatprep.subr.mxu0 0.0
          %461 = vmatpush2.msra.mxu0 0.0
          %462 = vmatprep.subr.mxu0 0.0
          %463 = vmatpush2.msra.mxu0 0.0
          %464 = vmatprep.subr.mxu0 0.0
          %465 = vmatpush2.msra.mxu0 0.0
          %466 = vmatprep.subr.mxu0 0.0
          %467 = vmatpush2.msra.mxu0 0.0
          %468 = vmatprep.mubr.f32.mxu0 0.0
          %469 = vmatmul.mubr.f32.gmra.mxu0 %v387
          %v470 = vpop.f32.mrf.mxu0
          %v471 = vadd.f32 0.0, %v470
          %v472 = vpop.f32.mrf.mxu0
          %473 = vdwg.mxu0
          %v474 = vadd.f32 %v386, %v471
          %475 = vst [vmem:[#allocation2] sm:$0xff] %v474
        $region48: #{mlp_forward.1} parent=39 // pred_fallthru
          _
        %p476 = scmp.eq.s32.totalorder %s24, 1
        // Predicated region
        $region49: #{mlp_forward.1} parent=39 // pred_check
          %p477 = pneg %p476
        $region50: #{mlp_forward.1} parent=39 // pred_check_branch
          %479 = sbr.rel (%p477) target = $region52
        $region51: #{mlp_forward.1} parent=39 // pred_region
          %v480 = vld [vmem:[#allocation2] sm:$0xff]
          %v481 = vld [vmem:[%s2] sm:$0x1]
          %v483 = vlaneseq
          %v484 = vshrl.u32 %v483, 7
          %v485 = vsub.s32 0, %v484
          %v486 = vrot.slane %v481, %v485
          %v488 = vadd.f32 %v480, %v486
          %v489 = vmax.f32 %v488, 0.0
          %490 = vst [vmem:[#allocation2] sm:$0xff] %v489
        $region52: #{mlp_forward.1} parent=39 // pred_fallthru
          _
        %p491 = scmp.ge.s32.totalorder %s24, 1
        // Predicated region
        $region53: #{mlp_forward.1} parent=39 // pred_check
          %p492 = pneg %p491
        $region54: #{mlp_forward.1} parent=39 // pred_check_branch
          %494 = sbr.rel (%p492) target = $region56
        $region55: #{mlp_forward.1} parent=39 // pred_region
          %v495 = vld [vmem:[#allocation2] sm:$0xff]
          %v496 = vld [vmem:[%s361] sm:$0xff]
          %v497 = vld [vmem:[%s361 + $0x8] sm:$0xff]
          %v498 = vld [vmem:[%s361 + $0x10] sm:$0xff]
          %v499 = vld [vmem:[%s361 + $0x18] sm:$0xff]
          %v500 = vld [vmem:[%s361 + $0x20] sm:$0xff]
          %v501 = vld [vmem:[%s361 + $0x28] sm:$0xff]
          %v502 = vld [vmem:[%s361 + $0x30] sm:$0xff]
          %v503 = vld [vmem:[%s361 + $0x38] sm:$0xff]
          %v504 = vld [vmem:[%s361 + $0x40] sm:$0xff]
          %v505 = vld [vmem:[%s361 + $0x48] sm:$0xff]
          %v506 = vld [vmem:[%s361 + $0x50] sm:$0xff]
          %v507 = vld [vmem:[%s361 + $0x58] sm:$0xff]
          %v508 = vld [vmem:[%s361 + $0x60] sm:$0xff]
          %v509 = vld [vmem:[%s361 + $0x68] sm:$0xff]
          %v510 = vld [vmem:[%s361 + $0x70] sm:$0xff]
          %v511 = vld [vmem:[%s361 + $0x78] sm:$0xff]
          %v512 = vld [vmem:[%s370] sm:$0x1]
          %v514 = vlaneseq
          %v515 = vshrl.u32 %v514, 7
          %v516 = vsub.s32 0, %v515
          %v517 = vrot.slane %v512, %v516
          %519 = vmatprep.subr.mxu0 0.0
          %520 = vmatpush1.msra.mxu0 %v511
          %521 = vmatprep.subr.mxu0 0.0
          %522 = vmatpush1.msra.mxu0 %v510
          %523 = vmatprep.subr.mxu0 0.0
          %524 = vmatpush1.msra.mxu0 %v509
          %525 = vmatprep.subr.mxu0 0.0
          %526 = vmatpush1.msra.mxu0 %v508
          %527 = vmatprep.subr.mxu0 0.0
          %528 = vmatpush1.msra.mxu0 %v507
          %529 = vmatprep.subr.mxu0 0.0
          %530 = vmatpush1.msra.mxu0 %v506
          %531 = vmatprep.subr.mxu0 0.0
          %532 = vmatpush1.msra.mxu0 %v505
          %533 = vmatprep.subr.mxu0 0.0
          %534 = vmatpush1.msra.mxu0 %v504
          %535 = vmatprep.subr.mxu0 0.0
          %536 = vmatpush1.msra.mxu0 %v503
          %537 = vmatprep.subr.mxu0 0.0
          %538 = vmatpush1.msra.mxu0 %v502
          %539 = vmatprep.subr.mxu0 0.0
          %540 = vmatpush1.msra.mxu0 %v501
          %541 = vmatprep.subr.mxu0 0.0
          %542 = vmatpush1.msra.mxu0 %v500
          %543 = vmatprep.subr.mxu0 0.0
          %544 = vmatpush1.msra.mxu0 %v499
          %545 = vmatprep.subr.mxu0 0.0
          %546 = vmatpush1.msra.mxu0 %v498
          %547 = vmatprep.subr.mxu0 0.0
          %548 = vmatpush1.msra.mxu0 %v497
          %549 = vmatprep.subr.mxu0 0.0
          %550 = vmatpush1.msra.mxu0 %v496
          %551 = vmatprep.subr.mxu0 0.0
          %552 = vmatpush2.msra.mxu0 0.0
          %553 = vmatprep.subr.mxu0 0.0
          %554 = vmatpush2.msra.mxu0 0.0
          %555 = vmatprep.subr.mxu0 0.0
          %556 = vmatpush2.msra.mxu0 0.0
          %557 = vmatprep.subr.mxu0 0.0
          %558 = vmatpush2.msra.mxu0 0.0
          %559 = vmatprep.subr.mxu0 0.0
          %560 = vmatpush2.msra.mxu0 0.0
          %561 = vmatprep.subr.mxu0 0.0
          %562 = vmatpush2.msra.mxu0 0.0
          %563 = vmatprep.subr.mxu0 0.0
          %564 = vmatpush2.msra.mxu0 0.0
          %565 = vmatprep.subr.mxu0 0.0
          %566 = vmatpush2.msra.mxu0 0.0
          %567 = vmatprep.subr.mxu0 0.0
          %568 = vmatpush2.msra.mxu0 0.0
          %569 = vmatprep.subr.mxu0 0.0
          %570 = vmatpush2.msra.mxu0 0.0
          %571 = vmatprep.subr.mxu0 0.0
          %572 = vmatpush2.msra.mxu0 0.0
          %573 = vmatprep.subr.mxu0 0.0
          %574 = vmatpush2.msra.mxu0 0.0
          %575 = vmatprep.subr.mxu0 0.0
          %576 = vmatpush2.msra.mxu0 0.0
          %577 = vmatprep.subr.mxu0 0.0
          %578 = vmatpush2.msra.mxu0 0.0
          %579 = vmatprep.subr.mxu0 0.0
          %580 = vmatpush2.msra.mxu0 0.0
          %581 = vmatprep.subr.mxu0 0.0
          %582 = vmatpush2.msra.mxu0 0.0
          %583 = vmatprep.mubr.f32.mxu0 0.0
          %584 = vmatmul.mubr.f32.gmra.mxu0 %v495
          %v585 = vpop.f32.mrf.mxu0
          %v586 = vadd.f32 %v517, %v585
          %v587 = vpop.f32.mrf.mxu0
          %588 = vdwg.mxu0
          %589 = vst [vmem:[%s333] sm:$0xff] %v586
        $region56: #{mlp_forward.1} parent=39 // pred_fallthru
          _
        %s590 = sand.u32 %s194, 1
        %s591 = scalar_lea.sflag [#allocation4], %s590
        %s592 = sand.u32 %s194, 1
        %s593 = smul.addr %s592, 8
        %s594 = scalar_lea.vmem [#allocation3], %s593
        // Predicated region
        $region57: #{mlp_forward.1} parent=39 // pred_check
          %p595 = pneg %p204
        $region58: #{mlp_forward.1} parent=39 // pred_check_branch
          %597 = sbr.rel (%p595) target = $region60
        $region59: #{mlp_forward.1} parent=39 // pred_region
          %s598 = ssub.s32 %s24, 1
          %p599 = scmp.gt.s32.totalorder %s598, 0
          %s600 = scalar_select %p599, %s598, 0
          %s602 = ssub.s32 128, 128
          %603 = vsyncadd %s591, %s602
          %s604 = sadd.s32 %s600, %s23
          %s605 = smul.addr %s604, 128
          %s606 = scalar_lea.hbm %s5, %s605
          %s608 = sshll.u32 %s594, 4
          %s609 = int_to_ptr.vmem [resolvable:$true] %s608
          %611 = dma.vmem_to_hbm [thread:$0]  %s609, 128, %s606, %s591
        $region60: #{mlp_forward.1} parent=39 // pred_fallthru
          _
      $region40: #{mlp_forward.1} parent=5 // pred_fallthru
        _
      %p612 = scmp.le.s32.totalorder 2, %s14
      // Predicated region
      $region61: #{mlp_forward.1} parent=5 // pred_check
        %p613 = pneg %p612
      $region62: #{mlp_forward.1} parent=5 // pred_check_branch
        %615 = sbr.rel (%p613) target = $region64
      $region63: #{mlp_forward.1} parent=5 // pred_region
        %s616 = ssub.s32 %s14, 2
        // Predicated region
        $region65: #{mlp_forward.1} parent=63 // pred_check
          %p617 = pneg %p210
        $region66: #{mlp_forward.1} parent=63 // pred_check_branch
          %619 = sbr.rel (%p617) target = $region68
        $region67: #{mlp_forward.1} parent=63 // pred_region
          %s620 = sand.u32 %s195, 1
          %s621 = scalar_lea.sflag [#allocation4], %s620
          %s622 = sand.u32 %s195, 1
          %s623 = smul.addr %s622, 8
          %s624 = scalar_lea.vmem [#allocation3], %s623
          %625 = dma.done %s621, 128
        $region68: #{mlp_forward.1} parent=63 // pred_fallthru
          _
      $region64: #{mlp_forward.1} parent=5 // pred_fallthru
        _
    $region6: #{mlp_forward.1} parent=1 // loop_footer
      %s18 = sadd.s32 1, %s14
    $region7: #{mlp_forward.1} parent=1 // loop_footer_branch
      %13 = sbr.rel target = $region3
    $region8: #{mlp_forward.1} parent=1 // loop_exit
      _
    %626 = vsyncpa [#allocation4], 1
    %s627 = scalar_lea.sflag [#allocation4], 1
    %628 = vsyncpa %s627, 1

</llo_original>
